<compile_context>
chip_gen: v7x
topology: tpu7x:2x2x1
jax: 0.10.0
libtpu: 0.0.40
codegen_flags: <defaults>
</compile_context>

<pallas_src>
import jax
import jax.numpy as jnp
from jax.experimental import pallas as pl
from jax.experimental.pallas import tpu as pltpu


def vit_output_kernel(x_ref, w_ref, b_ref, res_ref, o_ref, acc_ref):
    """x_ref: (tm, tk); w_ref: (tk, H); b_ref: (1, H); res_ref/o_ref: (tm, H);
    acc_ref: f32 (tm, H) scratch persisting across the K grid axis."""
    k = pl.program_id(1)

    @pl.when(k == 0)
    def _():
        acc_ref[...] = jnp.zeros_like(acc_ref)

    # MXU matmul with f32 accumulation; operands stay in their input dtype.
    acc_ref[...] += jnp.dot(x_ref[...], w_ref[...],
                            preferred_element_type=jnp.float32)

    @pl.when(k == pl.num_programs(1) - 1)
    def _():
        out = (acc_ref[...]
               + b_ref[...].astype(jnp.float32)          # bias, broadcast (1,H)
               + res_ref[...].astype(jnp.float32))       # residual add
        # Single lane-dense store of the whole (tm, H) tile.
        o_ref[...] = out.astype(o_ref.dtype)


def _pick_tile(total, preferred):
    """Largest divisor of `total` that is <= preferred (falls back to total)."""
    if total <= preferred:
        return total
    for t in range(preferred, 0, -1):
        if total % t == 0:
            return t
    return total


def vit_output(hidden_states, input_tensor, w, b):
    """hidden_states: [B, S, I]; input_tensor: [B, S, H];
    w: [H, I] (PyTorch nn.Linear [out, in] layout); b: [H].
    Returns [B, S, H] = hidden_states @ w.T + b + input_tensor."""
    B, S, I = hidden_states.shape
    H = input_tensor.shape[-1]

    # Flatten rows so the matmul M dimension is B*S (fills the MXU better than
    # per-batch-element grids) and pre-transpose the weight to [in, out].
    x2 = hidden_states.reshape(B * S, I)
    res2 = input_tensor.reshape(B * S, H)
    w_t = w.T                      # [I, H]
    b2 = b[None, :]                # [1, H] — 2-D for VMEM

    M = B * S
    tm = _pick_tile(M, 256)        # row tile
    tk = _pick_tile(I, 512)        # reduction tile over intermediate_size

    grid = (M // tm, I // tk)

    out2 = pl.pallas_call(
        vit_output_kernel,
        out_shape=jax.ShapeDtypeStruct((M, H), hidden_states.dtype),
        grid=grid,
        in_specs=[
            pl.BlockSpec((tm, tk), lambda i, k: (i, k)),   # x rows / K-slice
            pl.BlockSpec((tk, H), lambda i, k: (k, 0)),    # weight K-slice
            pl.BlockSpec((1, H), lambda i, k: (0, 0)),     # bias (resident)
            pl.BlockSpec((tm, H), lambda i, k: (i, 0)),    # residual rows
        ],
        out_specs=pl.BlockSpec((tm, H), lambda i, k: (i, 0)),
        scratch_shapes=[pltpu.VMEM((tm, H), jnp.float32)],
        compiler_params=pltpu.CompilerParams(
            dimension_semantics=("parallel", "arbitrary")),
    )(x2, w_t, b2, res2)

    # TODO(synk): nn.Dropout(hidden_dropout_prob) omitted (eval / inference
    # mode); training-mode parity (stochastic masking) is not provided.
    return out2.reshape(B, S, H)


def vit_output_reference(hidden_states, input_tensor, w, b):
    """Pure-JAX reference mirroring the PyTorch forward (eval mode)."""
    y = jnp.einsum('bsi,hi->bsh', hidden_states.astype(jnp.float32),
                   w.astype(jnp.float32)) + b.astype(jnp.float32)
    y = y + input_tensor.astype(jnp.float32)
    return y.astype(hidden_states.dtype)


if __name__ == "__main__":
    # Small shapes consistent with the module: batch=2, seq=8, hidden=32,
    # intermediate = 4 * hidden = 128.
    B, S, H = 2, 8, 32
    I = 4 * H

    key = jax.random.PRNGKey(0)
    kx, kr, kw, kb = jax.random.split(key, 4)

    hidden_states = jax.random.normal(kx, (B, S, I), dtype=jnp.float32)
    input_tensor = jax.random.normal(kr, (B, S, H), dtype=jnp.float32)
    # nn.Linear(intermediate_size, hidden_size) weight: [out, in] = [H, I]
    w = jax.random.normal(kw, (H, I), dtype=jnp.float32) * 0.05
    b = jax.random.normal(kb, (H,), dtype=jnp.float32) * 0.05

    out = vit_output(hidden_states, input_tensor, w, b)
    out = jax.block_until_ready(out)

    ref = vit_output_reference(hidden_states, input_tensor, w, b)
    assert out.shape == (B, S, H)
    assert jnp.allclose(out, ref, atol=1e-4, rtol=1e-4), "mismatch vs reference"

    print("KERNEL_OK")
</pallas_src>

<mosaic_0001>
module attributes {stable_mosaic.version = 11 : i64} {
  func.func @vit_output_kernel(%arg0: i32, %arg1: i32, %arg2: memref<16x128xf32, #tpu.memory_space<vmem>>, %arg3: memref<128x32xf32, #tpu.memory_space<vmem>>, %arg4: memref<1x32xf32, #tpu.memory_space<vmem>>, %arg5: memref<16x32xf32, #tpu.memory_space<vmem>>, %arg6: memref<16x32xf32, #tpu.memory_space<vmem>>, %arg7: memref<16x32xf32, #tpu.memory_space<vmem>>) attributes {dimension_semantics = [#tpu.dimension_semantics<parallel>, #tpu.dimension_semantics<arbitrary>], iteration_bounds = array<i64: 1, 1>, scalar_prefetch = 0 : i64, scratch_operands = 1 : i64, tpu.core_type = #tpu.core_type<tc>, window_params = [{transform_indices = @transform_0, window_bounds = array<i64: 16, 128>}, {transform_indices = @transform_1, window_bounds = array<i64: 128, 32>}, {pipeline_mode = #tpu.pipeline_mode<synchronous>, transform_indices = @transform_2, window_bounds = array<i64: 1, 32>}, {transform_indices = @transform_3, window_bounds = array<i64: 16, 32>}, {transform_indices = @transform_4, window_bounds = array<i64: 16, 32>}]} {
    %c0_i32 = arith.constant 0 : i32
    %0 = arith.cmpi eq, %arg1, %c0_i32 : i32
    %1 = arith.extui %0 : i1 to i32
    %c0_i32_0 = arith.constant 0 : i32
    %2 = arith.cmpi ne, %1, %c0_i32_0 : i32
    scf.if %2 {
      %cst_10 = arith.constant 0.000000e+00 : f32
      %12 = vector.broadcast %cst_10 : f32 to vector<16x32xf32>
      %c0_11 = arith.constant 0 : index
      %c0_12 = arith.constant 0 : index
      %13 = vector.load %arg7[%c0_11, %c0_12] : memref<16x32xf32, #tpu.memory_space<vmem>>, vector<16x32xf32>
      tpu.vector_store %arg7[%c0_11, %c0_12], %12 {strides = array<i32>} : memref<16x32xf32, #tpu.memory_space<vmem>>, vector<16x32xf32>,
    } else {
    }
    %c0 = arith.constant 0 : index
    %c0_1 = arith.constant 0 : index
    %3 = vector.load %arg7[%c0, %c0_1] : memref<16x32xf32, #tpu.memory_space<vmem>>, vector<16x32xf32>
    %c0_2 = arith.constant 0 : index
    %c0_3 = arith.constant 0 : index
    %4 = vector.load %arg2[%c0_2, %c0_3] : memref<16x128xf32, #tpu.memory_space<vmem>>, vector<16x128xf32>
    %c0_4 = arith.constant 0 : index
    %c0_5 = arith.constant 0 : index
    %5 = vector.load %arg3[%c0_4, %c0_5] : memref<128x32xf32, #tpu.memory_space<vmem>>, vector<128x32xf32>
    %cst = arith.constant dense<0.000000e+00> : vector<16x32xf32>
    %6 = tpu.matmul %4, %5, %cst {dimension_numbers = #tpu.dot_dimension_numbers<[1], [0], [0], [1], [0, 0, 1, 1], [], []>} : vector<16x128xf32>, vector<128x32xf32>, vector<16x32xf32> -> vector<16x32xf32>
    %7 = arith.addf %3, %6 : vector<16x32xf32>
    %c0_6 = arith.constant 0 : index
    %c0_7 = arith.constant 0 : index
    %8 = vector.load %arg7[%c0_6, %c0_7] : memref<16x32xf32, #tpu.memory_space<vmem>>, vector<16x32xf32>
    tpu.vector_store %arg7[%c0_6, %c0_7], %7 {strides = array<i32>} : memref<16x32xf32, #tpu.memory_space<vmem>>, vector<16x32xf32>,
    %c0_i32_8 = arith.constant 0 : i32
    %9 = arith.cmpi eq, %arg1, %c0_i32_8 : i32
    %10 = arith.extui %9 : i1 to i32
    %c0_i32_9 = arith.constant 0 : i32
    %11 = arith.cmpi ne, %10, %c0_i32_9 : i32
    scf.if %11 {
      %c0_10 = arith.constant 0 : index
      %c0_11 = arith.constant 0 : index
      %12 = vector.load %arg7[%c0_10, %c0_11] : memref<16x32xf32, #tpu.memory_space<vmem>>, vector<16x32xf32>
      %c0_12 = arith.constant 0 : index
      %c0_13 = arith.constant 0 : index
      %13 = vector.load %arg4[%c0_12, %c0_13] : memref<1x32xf32, #tpu.memory_space<vmem>>, vector<1x32xf32>
      %14 = vector.broadcast %13 : vector<1x32xf32> to vector<16x32xf32>
      %15 = arith.addf %12, %14 : vector<16x32xf32>
      %c0_14 = arith.constant 0 : index
      %c0_15 = arith.constant 0 : index
      %16 = vector.load %arg5[%c0_14, %c0_15] : memref<16x32xf32, #tpu.memory_space<vmem>>, vector<16x32xf32>
      %17 = arith.addf %15, %16 : vector<16x32xf32>
      %c0_16 = arith.constant 0 : index
      %c0_17 = arith.constant 0 : index
      %18 = vector.load %arg6[%c0_16, %c0_17] : memref<16x32xf32, #tpu.memory_space<vmem>>, vector<16x32xf32>
      tpu.vector_store %arg6[%c0_16, %c0_17], %17 {strides = array<i32>} : memref<16x32xf32, #tpu.memory_space<vmem>>, vector<16x32xf32>,
    } else {
    }
    return
  }
  func.func @transform_0(%arg0: i32, %arg1: i32) -> (i32, i32) {
    %c0_i32 = arith.constant 0 : i32
    return %arg0, %arg1 : i32, i32
  }
  func.func @transform_1(%arg0: i32, %arg1: i32) -> (i32, i32) {
    %c0_i32 = arith.constant 0 : i32
    %c0_i32_0 = arith.constant 0 : i32
    return %arg1, %c0_i32 : i32, i32
  }
  func.func @transform_2(%arg0: i32, %arg1: i32) -> (i32, i32) {
    %c0_i32 = arith.constant 0 : i32
    %c0_i32_0 = arith.constant 0 : i32
    %c0_i32_1 = arith.constant 0 : i32
    return %c0_i32, %c0_i32_0 : i32, i32
  }
  func.func @transform_3(%arg0: i32, %arg1: i32) -> (i32, i32) {
    %c0_i32 = arith.constant 0 : i32
    %c0_i32_0 = arith.constant 0 : i32
    return %arg0, %c0_i32 : i32, i32
  }
  func.func @transform_4(%arg0: i32, %arg1: i32) -> (i32, i32) {
    %c0_i32 = arith.constant 0 : i32
    %c0_i32_0 = arith.constant 0 : i32
    return %arg0, %c0_i32 : i32, i32
  }
}

</mosaic_0001>

<llo_original>
// kernel: tpu_custom_call.1
$region0: #{tpu_custom_call.1}
  #allocation0 [shape = 'u32[]', space=smem, size = 0x4, offset = 0x4, fixed_abs, tag = 'smem constant byte address 0x4 - core index']
  #allocation1 [shape = 'u32[144,128]{1,0:T(1,128)}', space=vmem, size = 0x12000, scoped, tag = 'internal scratch']
  #allocation2 [shape = 'f32[16,32]{1,0:T(8,128)}', space=vmem, size = 0x2000, scoped, tag = 'scratch operand']
  %s0 = inlined_call_operand.vmem [shape: f32[16,128], index: 0, kind: input, shape index: {}]
  %s1 = inlined_call_operand.vmem [shape: f32[128,32], index: 1, kind: input, shape index: {}]
  %s2 = inlined_call_operand.vmem [shape: f32[1,32], index: 2, kind: input, shape index: {}]
  %s3 = inlined_call_operand.vmem [shape: f32[16,32], index: 3, kind: input, shape index: {}]
  %s4 = inlined_call_operand.hbm [shape: f32[16,32], index: 4, kind: output, shape index: {}]
  %s5 = sld [smem:[#allocation0]]
  $region34: #{tpu_custom_call.1} parent=0
    _
  %s7 = ssub.s32 1, %s5
  %s8 = scalar_select 0, %s7, %s5
  $region1: #{tpu_custom_call.1} parent=0
    #allocation3 [shape = 'u8[8192]{0}', space=vmem, size = 0x2000, scoped, tag = 'output window, operand 0, single buffered']
    #allocation4 [shape = 's32[1]{0}', space=sflag, size = 0x4, scoped, tag = 'scoped memory for tpu_custom_call.1']
    %9 = vsyncpa [#allocation4], 0
    // Predicated region
    $region2: #{tpu_custom_call.1} parent=1 // pred_check
      _
    $region3: #{tpu_custom_call.1} parent=1 // pred_check_branch
      %11 = sbr.rel (0) target = $region5
    $region4: #{tpu_custom_call.1} parent=1 // pred_region
      _
    $region5: #{tpu_custom_call.1} parent=1 // pred_fallthru
      _
    // Predicated region
    $region6: #{tpu_custom_call.1} parent=1 // pred_check
      _
    $region7: #{tpu_custom_call.1} parent=1 // pred_check_branch
      %13 = sbr.rel (0) target = $region9
    $region8: #{tpu_custom_call.1} parent=1 // pred_region
      _
    $region9: #{tpu_custom_call.1} parent=1 // pred_fallthru
      _
    // Predicated region
    $region10: #{tpu_custom_call.1} parent=1 // pred_check
      _
    $region11: #{tpu_custom_call.1} parent=1 // pred_check_branch
      %15 = sbr.rel (0) target = $region13
    $region12: #{tpu_custom_call.1} parent=1 // pred_region
      _
    $region13: #{tpu_custom_call.1} parent=1 // pred_fallthru
      _
    // Predicated region
    $region14: #{tpu_custom_call.1} parent=1 // pred_check
      _
    $region15: #{tpu_custom_call.1} parent=1 // pred_check_branch
      %17 = sbr.rel (0) target = $region17
    $region16: #{tpu_custom_call.1} parent=1 // pred_region
      _
    $region17: #{tpu_custom_call.1} parent=1 // pred_fallthru
      _
    %p18 = scmp.eq.s32.totalorder 0, 0
    // Predicated region
    $region18: #{tpu_custom_call.1} parent=1 // pred_check
      %p19 = pneg %p18
    $region19: #{tpu_custom_call.1} parent=1 // pred_check_branch
      %21 = sbr.rel (%p19) target = $region21
    $region20: #{tpu_custom_call.1} parent=1 // pred_region
      %vm22 = vcmask 261120
      %23 = vst.msk [vmem:[#allocation2] sm:$0xff] %vm22, 0.0
      %24 = vst.msk [vmem:[#allocation2 + $0x8] sm:$0xff] %vm22, 0.0
    $region21: #{tpu_custom_call.1} parent=1 // pred_fallthru
      _
    %v25 = vld [vmem:[#allocation2] sm:$0xff]
    %v26 = vld [vmem:[#allocation2 + $0x8] sm:$0xff]
    %v27 = vld [vmem:[%s0] sm:$0xff]
    %v28 = vld [vmem:[%s0 + $0x8] sm:$0xff]
    %v29 = vld [vmem:[%s1] sm:$0xff]
    %v30 = vld [vmem:[%s1 + $0x8] sm:$0xff]
    %v31 = vld [vmem:[%s1 + $0x10] sm:$0xff]
    %v32 = vld [vmem:[%s1 + $0x18] sm:$0xff]
    %v33 = vld [vmem:[%s1 + $0x20] sm:$0xff]
    %v34 = vld [vmem:[%s1 + $0x28] sm:$0xff]
    %v35 = vld [vmem:[%s1 + $0x30] sm:$0xff]
    %v36 = vld [vmem:[%s1 + $0x38] sm:$0xff]
    %v37 = vld [vmem:[%s1 + $0x40] sm:$0xff]
    %v38 = vld [vmem:[%s1 + $0x48] sm:$0xff]
    %v39 = vld [vmem:[%s1 + $0x50] sm:$0xff]
    %v40 = vld [vmem:[%s1 + $0x58] sm:$0xff]
    %v41 = vld [vmem:[%s1 + $0x60] sm:$0xff]
    %v42 = vld [vmem:[%s1 + $0x68] sm:$0xff]
    %v43 = vld [vmem:[%s1 + $0x70] sm:$0xff]
    %v44 = vld [vmem:[%s1 + $0x78] sm:$0xff]
    %45 = vmatprep.subr.mxu0 0.0
    %46 = vmatpush1.msra.mxu0 %v29
    %47 = vmatprep.subr.mxu0 0.0
    %48 = vmatpush1.msra.mxu0 %v30
    %49 = vmatprep.subr.mxu0 0.0
    %50 = vmatpush1.msra.mxu0 %v31
    %51 = vmatprep.subr.mxu0 0.0
    %52 = vmatpush1.msra.mxu0 %v32
    %53 = vmatprep.subr.mxu0 0.0
    %54 = vmatpush1.msra.mxu0 %v33
    %55 = vmatprep.subr.mxu0 0.0
    %56 = vmatpush1.msra.mxu0 %v34
    %57 = vmatprep.subr.mxu0 0.0
    %58 = vmatpush1.msra.mxu0 %v35
    %59 = vmatprep.subr.mxu0 0.0
    %60 = vmatpush1.msra.mxu0 %v36
    %61 = vmatprep.subr.mxu0 0.0
    %62 = vmatpush1.msra.mxu0 %v37
    %63 = vmatprep.subr.mxu0 0.0
    %64 = vmatpush1.msra.mxu0 %v38
    %65 = vmatprep.subr.mxu0 0.0
    %66 = vmatpush1.msra.mxu0 %v39
    %67 = vmatprep.subr.mxu0 0.0
    %68 = vmatpush1.msra.mxu0 %v40
    %69 = vmatprep.subr.mxu0 0.0
    %70 = vmatpush1.msra.mxu0 %v41
    %71 = vmatprep.subr.mxu0 0.0
    %72 = vmatpush1.msra.mxu0 %v42
    %73 = vmatprep.subr.mxu0 0.0
    %74 = vmatpush1.msra.mxu0 %v43
    %75 = vmatprep.subr.mxu0 0.0
    %76 = vmatpush1.msra.mxu0 %v44
    %77 = vmatprep.subr.mxu0 0.0
    %78 = vmatpush1.msra.mxu0 0.0
    %79 = vmatprep.subr.mxu0 0.0
    %80 = vmatpush1.msra.mxu0 0.0
    %81 = vmatprep.subr.mxu0 0.0
    %82 = vmatpush1.msra.mxu0 0.0
    %83 = vmatprep.subr.mxu0 0.0
    %84 = vmatpush1.msra.mxu0 0.0
    %85 = vmatprep.subr.mxu0 0.0
    %86 = vmatpush1.msra.mxu0 0.0
    %87 = vmatprep.subr.mxu0 0.0
    %88 = vmatpush1.msra.mxu0 0.0
    %89 = vmatprep.subr.mxu0 0.0
    %90 = vmatpush1.msra.mxu0 0.0
    %91 = vmatprep.subr.mxu0 0.0
    %92 = vmatpush1.msra.mxu0 0.0
    %93 = vmatprep.subr.mxu0 0.0
    %94 = vmatpush1.msra.mxu0 0.0
    %95 = vmatprep.subr.mxu0 0.0
    %96 = vmatpush1.msra.mxu0 0.0
    %97 = vmatprep.subr.mxu0 0.0
    %98 = vmatpush1.msra.mxu0 0.0
    %99 = vmatprep.subr.mxu0 0.0
    %100 = vmatpush1.msra.mxu0 0.0
    %101 = vmatprep.subr.mxu0 0.0
    %102 = vmatpush1.msra.mxu0 0.0
    %103 = vmatprep.subr.mxu0 0.0
    %104 = vmatpush1.msra.mxu0 0.0
    %105 = vmatprep.subr.mxu0 0.0
    %106 = vmatpush1.msra.mxu0 0.0
    %107 = vmatprep.subr.mxu0 0.0
    %108 = vmatpush1.msra.mxu0 0.0
    %109 = vmatprep.mubr.f32.mxu0 0.0
    %110 = vmatmul.mubr.f32.gmra.mrb[0].mxu0 %v27
    %v111 = vpop.f32.mrb[0].mxu0
    %v112 = vadd.f32 0.0, %v111
    %v113 = vpop.f32.mrb[0].mxu0
    %114 = vmatprep.mubr.f32.mxu0 0.0
    %115 = vmatmul.mubr.f32.gmra.mrb[0].mxu0 %v28
    %v116 = vpop.f32.mrb[0].mxu0
    %v117 = vadd.f32 0.0, %v116
    %v118 = vpop.f32.mrb[0].mxu0
    %119 = vdwg.mxu0
    %v120 = vadd.f32 %v25, %v112
    %v121 = vadd.f32 %v26, %v117
    %vm122 = vcmask 261120
    %123 = vst.msk [vmem:[#allocation2] sm:$0xff] %vm122, %v120
    %124 = vst.msk [vmem:[#allocation2 + $0x8] sm:$0xff] %vm122, %v121
    // Predicated region
    $region22: #{tpu_custom_call.1} parent=1 // pred_check
      %p125 = pneg %p18
    $region23: #{tpu_custom_call.1} parent=1 // pred_check_branch
      %127 = sbr.rel (%p125) target = $region25
    $region24: #{tpu_custom_call.1} parent=1 // pred_region
      %v128 = vld [vmem:[#allocation2] sm:$0xff]
      %v129 = vld [vmem:[#allocation2 + $0x8] sm:$0xff]
      %v130 = vld [vmem:[%s2] sm:$0x1]
      %v132 = vlaneseq
      %v133 = vshrl.u32 %v132, 7
      %v134 = vsub.s32 0, %v133
      %v135 = vrot.slane %v130, %v134
      %v137 = vadd.f32 %v128, %v135
      %v138 = vadd.f32 %v129, %v135
      %v139 = vld [vmem:[%s3] sm:$0xff]
      %v140 = vld [vmem:[%s3 + $0x8] sm:$0xff]
      %v141 = vadd.f32 %v137, %v139
      %v142 = vadd.f32 %v138, %v140
      %143 = vst.msk [vmem:[#allocation3] sm:$0xff] %vm122, %v141
      %144 = vst.msk [vmem:[#allocation3 + $0x8] sm:$0xff] %vm122, %v142
    $region25: #{tpu_custom_call.1} parent=1 // pred_fallthru
      _
    // Predicated region
    $region26: #{tpu_custom_call.1} parent=1 // pred_check
      _
    $region27: #{tpu_custom_call.1} parent=1 // pred_check_branch
      %146 = sbr.rel (0) target = $region29
    $region28: #{tpu_custom_call.1} parent=1 // pred_region
      %s148 = ssub.s32 256, 256
      %149 = vsyncadd [#allocation4], %s148
      %s150 = sshll.u32 [#allocation3], 4
      %s151 = int_to_ptr.vmem [resolvable:$true] %s150
      %156 = dma.vmem_to_hbm [thread:$0]  %s151, 256, %s4, [#allocation4], 128, 128, 8
    $region29: #{tpu_custom_call.1} parent=1 // pred_fallthru
      _
    // Predicated region
    $region30: #{tpu_custom_call.1} parent=1 // pred_check
      _
    $region31: #{tpu_custom_call.1} parent=1 // pred_check_branch
      %158 = sbr.rel (0) target = $region33
    $region32: #{tpu_custom_call.1} parent=1 // pred_region
      %159 = dma.done [#allocation4], 256
    $region33: #{tpu_custom_call.1} parent=1 // pred_fallthru
      _
    %160 = vsyncpa [#allocation4], 1

</llo_original>
